<compile_context>
chip_gen: v6e
topology: v6e:2x2x1
jax: 0.10.0
libtpu: 0.0.40
codegen_flags: <defaults>
</compile_context>

<pallas_src>
import numpy as np
import jax
import jax.numpy as jnp
from jax import lax
from jax.experimental import pallas as pl
from jax.experimental.pallas import tpu as pltpu


# -----------------------------------------------------------------------------
# Pallas kernel: one (batch-block, row-tile) of PatchMergeDownsample.
#   x_ref : (bb, th, d, Wo, d*C)   bf16
#   w_ref : (d, d*C, CoutP)        bf16   (1x1-conv weight, rows ordered (dx, c))
#   o_ref : (bb, th, Wo, CoutP)    bf16   (CoutP = Cout padded to a multiple of 128)
# -----------------------------------------------------------------------------
def _patch_merge_kernel(x_ref, w_ref, o_ref):
    bb, th, d, Wo, K = x_ref.shape
    CoutP = o_ref.shape[-1]
    P = bb * th * Wo

    # d shifted matmuls, f32 accumulation.  Each dy plane is loaded from the ref
    # just before its dot so the full 5-D block is never live in vregs at once.
    acc = jnp.dot(x_ref[:, :, 0, :, :].reshape(P, K), w_ref[0],
                  preferred_element_type=jnp.float32)
    for dy in range(1, d):                       # static unroll
        acc = acc + jnp.dot(x_ref[:, :, dy, :, :].reshape(P, K), w_ref[dy],
                            preferred_element_type=jnp.float32)

    o_ref[...] = acc.reshape(bb, th, Wo, CoutP).astype(o_ref.dtype)


def _pick_row_tile(Ho, per_row_bytes, budget_bytes):
    """Largest divisor of Ho whose block stays under the per-step VMEM budget."""
    best = 1
    for t in range(1, Ho + 1):
        if Ho % t == 0 and t * per_row_bytes <= budget_bytes:
            best = t
    return best


# -----------------------------------------------------------------------------
# Native (NHWC / bf16) wrapper — the recommended entry point; no wrapper transposes.
# -----------------------------------------------------------------------------
def patch_merge_downsample_nhwc(x_nhwc, w_k, *, down_factor=2, batch_block=1,
                                compute_dtype=jnp.bfloat16,
                                row_budget_bytes=1 << 20):
    """x_nhwc: (B, H, W, C).  w_k: (d, d*C, Cout) 1x1-conv weight with the K axis
    ordered (dx, c).  Returns (B, H//d, W//d, Cout) in `compute_dtype`."""
    B, H, W, C = x_nhwc.shape
    d = down_factor
    assert H % d == 0 and W % d == 0 and B % batch_block == 0
    Ho, Wo = H // d, W // d
    Cout = w_k.shape[-1]
    assert w_k.shape == (d, d * C, Cout)

    # Lane-dense output: pad Cout up to a multiple of 128 with zero weight columns
    # (weight-only, tiny; a real model would store the weight pre-padded once).
    CoutP = ((Cout + 127) // 128) * 128
    w_p = w_k.astype(compute_dtype)
    if CoutP != Cout:
        w_p = jnp.pad(w_p, ((0, 0), (0, 0), (0, CoutP - Cout)))

    # bf16 operands: native MXU rate + half the HBM/DMA bytes.  This cast is a no-op
    # when the surrounding model already runs bf16.
    x = x_nhwc if x_nhwc.dtype == compute_dtype else x_nhwc.astype(compute_dtype)
    x_r = x.reshape(B, Ho, d, Wo, d * C)          # see TODO(synk) on relayout above

    # Row-tile so the bf16 input + output blocks stay within the budget; the f32
    # accumulator is ~2x the output block, which this also bounds.
    itemsize = np.dtype(compute_dtype).itemsize
    per_row_bytes = batch_block * Wo * (d * d * C + CoutP) * itemsize
    th = _pick_row_tile(Ho, per_row_bytes, row_budget_bytes)

    out = pl.pallas_call(
        _patch_merge_kernel,
        out_shape=jax.ShapeDtypeStruct((B, Ho, Wo, CoutP), compute_dtype),
        grid_spec=pltpu.PrefetchScalarGridSpec(
            num_scalar_prefetch=0,
            grid=(B // batch_block, Ho // th),
            in_specs=[
                pl.BlockSpec((batch_block, th, d, Wo, d * C),
                             lambda b, h: (b, h, 0, 0, 0)),
                # Grid-invariant weight block: fetched once, re-used every step.
                pl.BlockSpec((d, d * C, CoutP), lambda b, h: (0, 0, 0)),
            ],
            out_specs=pl.BlockSpec((batch_block, th, Wo, CoutP),
                                   lambda b, h: (b, h, 0, 0)),
        ),
        compiler_params=pltpu.CompilerParams(
            dimension_semantics=("parallel", "parallel")),
    )(x_r, w_p)

    return out[..., :Cout] if CoutP != Cout else out


# -----------------------------------------------------------------------------
# PyTorch-interface adapter (NCHW in / NCHW out).  The transposes + f32->bf16 cast
# here are interface glue only; in production keep activations NHWC/bf16 end-to-end
# and call patch_merge_downsample_nhwc directly (zero wrapper data movement).
# -----------------------------------------------------------------------------
def patch_merge_downsample(x_nchw, w_oc, *, down_factor=2):
    """x_nchw: (B, C, H, W).  w_oc: (Cout, C*d*d) = squeezed weight of
    nn.Conv2d(channels*d*d, channels, 1, bias=False); merged-channel order is
    k = c*d*d + dy*d + dx (as produced by the module's reshape/permute)."""
    B, C, H, W = x_nchw.shape
    d = down_factor
    Cout = w_oc.shape[0]
    assert w_oc.shape == (Cout, C * d * d)

    x_nhwc = jnp.transpose(x_nchw, (0, 2, 3, 1))
    # Re-order weight rows from the module's merged (c, dy, dx) order to (dy, (dx, c)).
    w_k = jnp.transpose(w_oc.reshape(Cout, C, d, d), (2, 3, 1, 0))
    w_k = w_k.reshape(d, d * C, Cout)

    out_nhwc = patch_merge_downsample_nhwc(x_nhwc, w_k, down_factor=d)
    return jnp.transpose(out_nhwc, (0, 3, 1, 2))      # bf16, NCHW


# -----------------------------------------------------------------------------
# Pure-JAX reference (faithful transcription of the PyTorch forward, f32).
# -----------------------------------------------------------------------------
def _patch_merge_downsample_ref(x_nchw, w_oc, down_factor=2):
    B, C, H, W = x_nchw.shape
    d = down_factor
    xm = x_nchw.reshape(B, C, H // d, d, W // d, d)
    xm = jnp.transpose(xm, (0, 1, 3, 5, 2, 4)).reshape(B, C * d * d,
                                                       H // d, W // d)
    # norm=None -> identity
    return jnp.einsum('ok,bkhw->bohw', w_oc, xm,
                      precision=lax.Precision.HIGHEST)


if __name__ == "__main__":
    # Small shapes consistent with the module: batch=2, channels=4, spatial=16.
    B, C, H, W = 2, 4, 16, 16
    d = 2

    key = jax.random.PRNGKey(0)
    kx, kw = jax.random.split(key)
    x_nchw = jax.random.normal(kx, (B, C, H, W), jnp.float32)

    Km = C * d * d                      # merged channels = Conv2d fan_in (1x1)
    bound = 1.0 / np.sqrt(Km)           # PyTorch Conv2d default init bound
    w_oc = jax.random.uniform(kw, (C, Km), dtype=jnp.float32,
                              minval=-bound, maxval=bound)

    out = patch_merge_downsample(x_nchw, w_oc, down_factor=d)
    out = jax.block_until_ready(out)
    assert out.shape == (B, C, H // d, W // d), out.shape

    # Correctness vs. f32 reference.  The kernel intentionally uses bf16 operands and
    # a bf16 output (f32 accumulation), so only bf16 rounding differs -> tol 2e-2.
    ref = _patch_merge_downsample_ref(x_nchw, w_oc, down_factor=d)
    np.testing.assert_allclose(np.asarray(out.astype(jnp.float32)),
                               np.asarray(ref), rtol=2e-2, atol=2e-2)

    print("KERNEL_OK")
</pallas_src>

<mosaic_0001>
module attributes {stable_mosaic.version = 11 : i64} {
  func.func @_patch_merge_kernel(%arg0: i32, %arg1: i32, %arg2: memref<1x8x2x8x8xbf16, #tpu.memory_space<vmem>>, %arg3: memref<2x8x128xbf16, #tpu.memory_space<vmem>>, %arg4: memref<1x8x8x128xbf16, #tpu.memory_space<vmem>>) attributes {dimension_semantics = [#tpu.dimension_semantics<parallel>, #tpu.dimension_semantics<parallel>], iteration_bounds = array<i64: 2, 1>, scalar_prefetch = 0 : i64, scratch_operands = 0 : i64, tpu.core_type = #tpu.core_type<tc>, window_params = [{transform_indices = @transform_0, window_bounds = array<i64: 1, 8, 2, 8, 8>}, {pipeline_mode = #tpu.pipeline_mode<synchronous>, transform_indices = @transform_1, window_bounds = array<i64: 2, 8, 128>}, {transform_indices = @transform_2, window_bounds = array<i64: 1, 8, 8, 128>}]} {
    %c0 = arith.constant 0 : index
    %c0_0 = arith.constant 0 : index
    %c0_1 = arith.constant 0 : index
    %c0_2 = arith.constant 0 : index
    %c0_3 = arith.constant 0 : index
    %0 = vector.load %arg2[%c0, %c0_0, %c0_1, %c0_2, %c0_3] : memref<1x8x2x8x8xbf16, #tpu.memory_space<vmem>>, vector<1x8x1x8x8xbf16>
    %1 = vector.shape_cast %0 : vector<1x8x1x8x8xbf16> to vector<1x8x8x8xbf16>
    %2 = vector.shape_cast %1 : vector<1x8x8x8xbf16> to vector<64x8xbf16>
    %c0_4 = arith.constant 0 : index
    %c0_5 = arith.constant 0 : index
    %c0_6 = arith.constant 0 : index
    %3 = vector.load %arg3[%c0_4, %c0_5, %c0_6] : memref<2x8x128xbf16, #tpu.memory_space<vmem>>, vector<1x8x128xbf16>
    %4 = vector.shape_cast %3 : vector<1x8x128xbf16> to vector<8x128xbf16>
    %cst = arith.constant dense<0.000000e+00> : vector<64x128xf32>
    %5 = tpu.matmul %2, %4, %cst {dimension_numbers = #tpu.dot_dimension_numbers<[1], [0], [0], [1], [0, 0, 1, 1], [], []>} : vector<64x8xbf16>, vector<8x128xbf16>, vector<64x128xf32> -> vector<64x128xf32>
    %c0_7 = arith.constant 0 : index
    %c0_8 = arith.constant 0 : index
    %c1 = arith.constant 1 : index
    %c0_9 = arith.constant 0 : index
    %c0_10 = arith.constant 0 : index
    %6 = vector.load %arg2[%c0_7, %c0_8, %c1, %c0_9, %c0_10] : memref<1x8x2x8x8xbf16, #tpu.memory_space<vmem>>, vector<1x8x1x8x8xbf16>
    %7 = vector.shape_cast %6 : vector<1x8x1x8x8xbf16> to vector<1x8x8x8xbf16>
    %8 = vector.shape_cast %7 : vector<1x8x8x8xbf16> to vector<64x8xbf16>
    %c1_11 = arith.constant 1 : index
    %c0_12 = arith.constant 0 : index
    %c0_13 = arith.constant 0 : index
    %9 = vector.load %arg3[%c1_11, %c0_12, %c0_13] : memref<2x8x128xbf16, #tpu.memory_space<vmem>>, vector<1x8x128xbf16>
    %10 = vector.shape_cast %9 : vector<1x8x128xbf16> to vector<8x128xbf16>
    %cst_14 = arith.constant dense<0.000000e+00> : vector<64x128xf32>
    %11 = tpu.matmul %8, %10, %cst_14 {dimension_numbers = #tpu.dot_dimension_numbers<[1], [0], [0], [1], [0, 0, 1, 1], [], []>} : vector<64x8xbf16>, vector<8x128xbf16>, vector<64x128xf32> -> vector<64x128xf32>
    %12 = arith.addf %5, %11 : vector<64x128xf32>
    %13 = vector.shape_cast %12 : vector<64x128xf32> to vector<1x8x8x128xf32>
    %14 = arith.truncf %13 : vector<1x8x8x128xf32> to vector<1x8x8x128xbf16>
    %c0_15 = arith.constant 0 : index
    %c0_16 = arith.constant 0 : index
    %c0_17 = arith.constant 0 : index
    %c0_18 = arith.constant 0 : index
    %15 = vector.load %arg4[%c0_15, %c0_16, %c0_17, %c0_18] : memref<1x8x8x128xbf16, #tpu.memory_space<vmem>>, vector<1x8x8x128xbf16>
    tpu.vector_store %arg4[%c0_15, %c0_16, %c0_17, %c0_18], %14 {strides = array<i32>} : memref<1x8x8x128xbf16, #tpu.memory_space<vmem>>, vector<1x8x8x128xbf16>,
    return
  }
  func.func @transform_0(%arg0: i32, %arg1: i32) -> (i32, i32, i32, i32, i32) {
    %c0_i32 = arith.constant 0 : i32
    %c0_i32_0 = arith.constant 0 : i32
    %c0_i32_1 = arith.constant 0 : i32
    %c0_i32_2 = arith.constant 0 : i32
    return %arg0, %arg1, %c0_i32, %c0_i32_0, %c0_i32_1 : i32, i32, i32, i32, i32
  }
  func.func @transform_1(%arg0: i32, %arg1: i32) -> (i32, i32, i32) {
    %c0_i32 = arith.constant 0 : i32
    %c0_i32_0 = arith.constant 0 : i32
    %c0_i32_1 = arith.constant 0 : i32
    %c0_i32_2 = arith.constant 0 : i32
    return %c0_i32, %c0_i32_0, %c0_i32_1 : i32, i32, i32
  }
  func.func @transform_2(%arg0: i32, %arg1: i32) -> (i32, i32, i32, i32) {
    %c0_i32 = arith.constant 0 : i32
    %c0_i32_0 = arith.constant 0 : i32
    %c0_i32_1 = arith.constant 0 : i32
    return %arg0, %arg1, %c0_i32, %c0_i32_0 : i32, i32, i32, i32
  }
}

</mosaic_0001>

<llo_original>
// kernel: tpu_custom_call.1
$region0: #{tpu_custom_call.1}
  #allocation0 [shape = 'u32[]', space=smem, size = 0x4, offset = 0x4, fixed_abs, tag = 'smem constant byte address 0x4 - core index']
  #allocation1 [shape = 'u32[144,128]{1,0:T(1,128)}', space=vmem, size = 0x12000, scoped, tag = 'internal scratch']
  %s0 = inlined_call_operand.hbm [shape: bf16[2,8,2,8,8], index: 0, kind: input, shape index: {}]
  %s1 = inlined_call_operand.hbm [shape: bf16[2,8,128], index: 1, kind: input, shape index: {}]
  %s2 = inlined_call_operand.hbm [shape: bf16[2,8,8,128], index: 2, kind: output, shape index: {}]
  %s3 = sld [smem:[#allocation0]]
  $region49: #{tpu_custom_call.1} parent=0
    _
  %s5 = ssub.s32 1, %s3
  %s6 = scalar_select 0, %s5, %s3
  $region1: #{tpu_custom_call.1} parent=0
    #allocation2 [shape = 'u8[65536]{0}', space=vmem, size = 0x10000, scoped, tag = 'input window, operand 0']
    #allocation3 [shape = 's32[2]{0}', space=sflag, size = 0x8, scoped, tag = 'scoped memory for tpu_custom_call.1']
    #allocation4 [shape = 's32[2]{0}', space=sflag, size = 0x8, scoped, tag = 'scoped memory for tpu_custom_call.1']
    #allocation5 [shape = 'u8[4096]{0}', space=vmem, size = 0x1000, scoped, tag = 'input window, operand 1, single buffered']
    #allocation6 [shape = 's32[1]{0}', space=sflag, size = 0x4, scoped, tag = 'scoped memory for tpu_custom_call.1']
    #allocation7 [shape = 'u8[32768]{0}', space=vmem, size = 0x8000, scoped, tag = 'output window, operand 0']
    %7 = vsyncpa [#allocation3], 0
    %s8 = scalar_lea.sflag [#allocation3], 1
    %9 = vsyncpa %s8, 0
    %10 = vsyncpa [#allocation6], 0
    %11 = vsyncpa [#allocation4], 0
    %s12 = scalar_lea.sflag [#allocation4], 1
    %13 = vsyncpa %s12, 0
    loop: start=0, step=1, limit=4
    $region2: #{tpu_custom_call.1} parent=1 // loop_pre_header
      _
    $region3: #{tpu_custom_call.1} parent=1 // loop_header
      %s15 = sphi 0, %s19
      %p16 = scmp.ge.s32.totalorder %s15, 4
      %s22 = sphi 0, %s34
      %s23 = sphi 0, %s30
      %s24 = sphi 0, %s22
      %s25 = sphi 0, %s23
      %s26 = sphi 0, %s24
      %s27 = sphi 0, %s25
      %s39 = sphi 0, %s41
      %s42 = sphi 0, %s39
      %s43 = sphi 0, %s42
      %s59 = sphi 0, %s43
      %s63 = sphi 0, %s63
      %s65 = sphi 0, %s63
      %s66 = sphi 0, %s65
      %s80 = sphi 0, %s66
      %s88 = sphi 0, %s90
      %s91 = sphi 0, %s88
      %s92 = sphi 0, %s91
      %s108 = sphi 0, %s92
    $region4: #{tpu_custom_call.1} parent=1 // loop_header_branch
      %18 = sbr.rel (%p16) target = $region8
    $region5: #{tpu_custom_call.1} parent=1 // loop_body
      %s20 = ssub.s32 %s15, 1
      %s21 = ssub.s32 %s15, 2
      %s28 = sadd.s32 1, %s23
      %p29 = scmp.ge.s32.totalorder %s28, 1
      %s30 = scalar_select %p29, 0, %s28
      %s31 = sadd.s32 1, %s22
      %s32 = scalar_select %p29, %s31, %s22
      %p33 = scmp.ge.s32.totalorder %s32, 2
      %s34 = scalar_select %p33, 0, %s32
      %s35 = ssub.s32 %s22, %s34
      %s36 = ssub.s32 %s23, %s30
      %s37 = sor.u32 %s35, %s36
      %p38 = scmp.eq.s32.totalorder %s37, 0
      %s40 = sadd.s32 %s39, 1
      %s41 = scalar_select %p38, %s39, %s40
      %p44 = pneg %p38
      %p45 = scmp.eq.s32.totalorder %s15, 1
      %p46 = por %p44, %p45
      %p47 = scmp.ne.s32.totalorder %s39, %s42
      %p48 = scmp.eq.s32.totalorder %s15, 0
      %p49 = por %p47, %p48
      %p50 = scmp.ne.s32.totalorder %s39, %s42
      %p51 = scmp.eq.s32.totalorder %s20, 1
      %p52 = por %p50, %p51
      %p53 = scmp.ne.s32.totalorder %s42, %s43
      %p54 = scmp.eq.s32.totalorder %s20, 0
      %p55 = por %p53, %p54
      %p56 = scmp.ne.s32.totalorder %s42, %s43
      %p57 = scmp.eq.s32.totalorder %s21, 1
      %p58 = por %p56, %p57
      %p60 = scmp.ne.s32.totalorder %s43, %s59
      %p61 = scmp.eq.s32.totalorder %s21, 0
      %p62 = por %p60, %p61
      %s64 = sadd.s32 %s63, 1
      %p67 = scmp.eq.s32.totalorder %s15, 1
      %p68 = scmp.ne.s32.totalorder %s63, %s65
      %p69 = scmp.eq.s32.totalorder %s15, 0
      %p70 = por %p68, %p69
      %p71 = scmp.ne.s32.totalorder %s63, %s65
      %p72 = scmp.eq.s32.totalorder %s20, 1
      %p73 = por %p71, %p72
      %p74 = scmp.ne.s32.totalorder %s65, %s66
      %p75 = scmp.eq.s32.totalorder %s20, 0
      %p76 = por %p74, %p75
      %p77 = scmp.ne.s32.totalorder %s65, %s66
      %p78 = scmp.eq.s32.totalorder %s21, 1
      %p79 = por %p77, %p78
      %p81 = scmp.ne.s32.totalorder %s66, %s80
      %p82 = scmp.eq.s32.totalorder %s21, 0
      %p83 = por %p81, %p82
      %s84 = ssub.s32 %s22, %s34
      %s85 = ssub.s32 %s23, %s30
      %s86 = sor.u32 %s84, %s85
      %p87 = scmp.eq.s32.totalorder %s86, 0
      %s89 = sadd.s32 %s88, 1
      %s90 = scalar_select %p87, %s88, %s89
      %p93 = pneg %p87
      %p94 = scmp.eq.s32.totalorder %s15, 1
      %p95 = por %p93, %p94
      %p96 = scmp.ne.s32.totalorder %s88, %s91
      %p97 = scmp.eq.s32.totalorder %s15, 0
      %p98 = por %p96, %p97
      %p99 = scmp.ne.s32.totalorder %s88, %s91
      %p100 = scmp.eq.s32.totalorder %s20, 1
      %p101 = por %p99, %p100
      %p102 = scmp.ne.s32.totalorder %s91, %s92
      %p103 = scmp.eq.s32.totalorder %s20, 0
      %p104 = por %p102, %p103
      %p105 = scmp.ne.s32.totalorder %s91, %s92
      %p106 = scmp.eq.s32.totalorder %s21, 1
      %p107 = por %p105, %p106
      %p109 = scmp.ne.s32.totalorder %s92, %s108
      %p110 = scmp.eq.s32.totalorder %s21, 0
      %p111 = por %p109, %p110
      %p112 = scmp.le.s32.totalorder 1, %s15
      %p113 = scmp.lt.s32.totalorder %s15, 3
      %p114 = pnand %p112, %p113
      %p115 = pneg %p114
      // Predicated region
      $region9: #{tpu_custom_call.1} parent=5 // pred_check
        _
      $region10: #{tpu_custom_call.1} parent=5 // pred_check_branch
        %117 = sbr.rel (%p114) target = $region12
      $region11: #{tpu_custom_call.1} parent=5 // pred_region
        %s118 = ssub.s32 %s15, 1
        // Predicated region
        $region13: #{tpu_custom_call.1} parent=11 // pred_check
          %p119 = pneg %p76
        $region14: #{tpu_custom_call.1} parent=11 // pred_check_branch
          %121 = sbr.rel (%p119) target = $region16
        $region15: #{tpu_custom_call.1} parent=11 // pred_region
          %s123 = ssub.s32 128, 128
          %124 = vsyncadd [#allocation6], %s123
          %s125 = sshll.u32 [#allocation5], 4
          %s126 = int_to_ptr.vmem [resolvable:$true] %s125
          %131 = dma.hbm_to_vmem [thread:$0]  %s1, 128, %s126, [#allocation6], 64, 64, 4
        $region16: #{tpu_custom_call.1} parent=11 // pred_fallthru
          _
      $region12: #{tpu_custom_call.1} parent=5 // pred_fallthru
        _
      %p132 = scmp.lt.s32.totalorder %s15, 2
      // Predicated region
      $region17: #{tpu_custom_call.1} parent=5 // pred_check
        %p133 = pneg %p132
      $region18: #{tpu_custom_call.1} parent=5 // pred_check_branch
        %135 = sbr.rel (%p133) target = $region20
      $region19: #{tpu_custom_call.1} parent=5 // pred_region
        // Predicated region
        $region21: #{tpu_custom_call.1} parent=19 // pred_check
          %p136 = pneg %p49
        $region22: #{tpu_custom_call.1} parent=19 // pred_check_branch
          %138 = sbr.rel (%p136) target = $region24
        $region23: #{tpu_custom_call.1} parent=19 // pred_region
          %s139 = sand.u32 %s39, 1
          %s140 = scalar_lea.sflag [#allocation3], %s139
          %s141 = sand.u32 %s39, 1
          %s142 = smul.addr %s141, 64
          %s143 = scalar_lea.vmem [#allocation2], %s142
          %s144 = smul.u32 8, %s23
          %s146 = ssub.s32 1024, 1024
          %147 = vsyncadd %s140, %s146
          %s148 = smul.addr %s144, 2
          %s149 = smul.addr %s22, 16
          %s150 = sadd.s32 %s148, %s149
          %s151 = smul.addr %s150, 64
          %s152 = scalar_lea.hbm %s0, %s151
          %s153 = sshll.u32 %s143, 4
          %s154 = int_to_ptr.vmem [resolvable:$true] %s153
          %159 = dma.hbm_to_vmem [thread:$0]  %s152, 1024, %s154, %s140, 64, 64, 4
        $region24: #{tpu_custom_call.1} parent=19 // pred_fallthru
          _
      $region20: #{tpu_custom_call.1} parent=5 // pred_fallthru
        _
      %p160 = scmp.le.s32.totalorder 1, %s15
      %p161 = scmp.lt.s32.totalorder %s15, 3
      %p162 = pnand %p160, %p161
      %p163 = pneg %p162
      // Predicated region
      $region25: #{tpu_custom_call.1} parent=5 // pred_check
        _
      $region26: #{tpu_custom_call.1} parent=5 // pred_check_branch
        %165 = sbr.rel (%p162) target = $region28
      $region27: #{tpu_custom_call.1} parent=5 // pred_region
        %s166 = ssub.s32 %s15, 1
        %s167 = sand.u32 %s42, 1
        %s168 = scalar_lea.sflag [#allocation3], %s167
        %s169 = sand.u32 %s42, 1
        %s170 = smul.addr %s169, 64
        %s171 = scalar_lea.vmem [#allocation2], %s170
        // Predicated region
        $region29: #{tpu_custom_call.1} parent=27 // pred_check
          %p172 = pneg %p55
        $region30: #{tpu_custom_call.1} parent=27 // pred_check_branch
          %174 = sbr.rel (%p172) target = $region32
        $region31: #{tpu_custom_call.1} parent=27 // pred_region
          %175 = dma.done %s168, 1024
        $region32: #{tpu_custom_call.1} parent=27 // pred_fallthru
          _
        // Predicated region
        $region33: #{tpu_custom_call.1} parent=27 // pred_check
          %p176 = pneg %p76
        $region34: #{tpu_custom_call.1} parent=27 // pred_check_branch
          %178 = sbr.rel (%p176) target = $region36
        $region35: #{tpu_custom_call.1} parent=27 // pred_region
          %179 = dma.done [#allocation6], 128
        $region36: #{tpu_custom_call.1} parent=27 // pred_fallthru
          _
        %s180 = sand.u32 %s42, 1
        %s181 = scalar_lea.sflag [#allocation3], %s180
        %s182 = sand.u32 %s42, 1
        %s183 = smul.addr %s182, 64
        %s184 = scalar_lea.vmem [#allocation2], %s183
        %p185 = pneg %p55
        %p186 = pneg %p52
        %p187 = pneg %p76
        %p188 = pneg %p73
        %p189 = pneg %p104
        %p190 = pneg %p101
        %s191 = sand.u32 %s91, 1
        %s192 = scalar_lea.sflag [#allocation4], %s191
        %s193 = sand.u32 %s91, 1
        %s194 = smul.addr %s193, 32
        %s195 = scalar_lea.vmem [#allocation7], %s194
        %s196 = smul.u32 8, %s25
        %s197 = smul.u32 8, %s25
        %v199 = vld [vmem:[%s171] sm:$0xf]
        %v200 = vld [vmem:[%s171 + $0x8] sm:$0xf]
        %v201 = vld [vmem:[%s171 + $0x10] sm:$0xf]
        %v202 = vld [vmem:[%s171 + $0x18] sm:$0xf]
        %v203 = vld [vmem:[%s171 + $0x20] sm:$0xf]
        %v204 = vld [vmem:[%s171 + $0x28] sm:$0xf]
        %v205 = vld [vmem:[%s171 + $0x30] sm:$0xf]
        %v206 = vld [vmem:[%s171 + $0x38] sm:$0xf]
        %v207 = vld [vmem:[#allocation5] sm:$0xf]
        %s208 = scalar_lea.vmem %s171, 4 [#allocation2]
        %v209 = vld [vmem:[%s208] sm:$0xf]
        %v210 = vld [vmem:[%s208 + $0x8] sm:$0xf]
        %v211 = vld [vmem:[%s208 + $0x10] sm:$0xf]
        %v212 = vld [vmem:[%s208 + $0x18] sm:$0xf]
        %v213 = vld [vmem:[%s208 + $0x20] sm:$0xf]
        %v214 = vld [vmem:[%s208 + $0x28] sm:$0xf]
        %v215 = vld [vmem:[%s208 + $0x30] sm:$0xf]
        %v216 = vld [vmem:[%s208 + $0x38] sm:$0xf]
        %s217 = scalar_lea.vmem [#allocation5], 4
        %v218 = vld [vmem:[%s217] sm:$0xf]
        %v227 = vunpack.c.l.b16 %v209
        %v228 = vunpack.c.l.b16 %v210
        %v229 = vunpack.c.l.b16 %v211
        %v230 = vunpack.c.l.b16 %v212
        %v231 = vunpack.c.l.b16 %v213
        %v232 = vunpack.c.l.b16 %v214
        %v233 = vunpack.c.l.b16 %v215
        %v234 = vunpack.c.l.b16 %v216
        %v235 = vpack.c.b16 %v228, %v227
        %v236 = vpack.c.b16 %v230, %v229
        %v237 = vpack.c.b16 %v232, %v231
        %v238 = vpack.c.b16 %v234, %v233
        %vm239 = vcmask 64512
        %v241 = vsel %vm239, %v235, 0
        %v244 = vsel %vm239, %v236, 0
        %v247 = vsel %vm239, %v237, 0
        %v250 = vsel %vm239, %v238, 0
        %vm252 = vcmask 1043456
        %v254 = vsel %vm252, %v218, 0
        %256 = vmatprep.subr.bf16.mxu0 0
        %257 = vmatpush1.bf16.msra.mxu0 0
        %258 = vmatprep.subr.bf16.mxu0 0
        %259 = vmatpush1.bf16.msra.mxu0 0
        %260 = vmatprep.subr.bf16.mxu0 0
        %261 = vmatpush1.bf16.msra.mxu0 0
        %262 = vmatprep.subr.bf16.mxu0 0
        %263 = vmatpush1.bf16.msra.mxu0 0
        %264 = vmatprep.subr.bf16.mxu0 0
        %265 = vmatpush1.bf16.msra.mxu0 0
        %266 = vmatprep.subr.bf16.mxu0 0
        %267 = vmatpush1.bf16.msra.mxu0 0
        %268 = vmatprep.subr.bf16.mxu0 0
        %269 = vmatpush1.bf16.msra.mxu0 0
        %270 = vmatprep.subr.bf16.mxu0 0
        %271 = vmatpush1.bf16.msra.mxu0 %v254
        %272 = vmatprep.subr.bf16.mxu0 0
        %273 = vmatpush2.bf16.msra.mxu0 0
        %274 = vmatprep.subr.bf16.mxu0 0
        %275 = vmatpush2.bf16.msra.mxu0 0
        %276 = vmatprep.subr.bf16.mxu0 0
        %277 = vmatpush2.bf16.msra.mxu0 0
        %278 = vmatprep.subr.bf16.mxu0 0
        %279 = vmatpush2.bf16.msra.mxu0 0
        %280 = vmatprep.subr.bf16.mxu0 0
        %281 = vmatpush2.bf16.msra.mxu0 0
        %282 = vmatprep.subr.bf16.mxu0 0
        %283 = vmatpush2.bf16.msra.mxu0 0
        %284 = vmatprep.subr.bf16.mxu0 0
        %285 = vmatpush2.bf16.msra.mxu0 0
        %286 = vmatprep.subr.bf16.mxu0 0
        %287 = vmatpush2.bf16.msra.mxu0 0
        %288 = vmatprep.mubr.bf16.mxu0 0
        %289 = vmatmul.mubr.bf16.gmra.mxu0 %v241
        %v290 = vpop.f32.mrf.mxu0
        %v291 = vadd.f32 0.0, %v290
        %v292 = vpop.f32.mrf.mxu0
        %v293 = vpop.f32.mrf.mxu0
        %v294 = vadd.f32 0.0, %v293
        %v295 = vpop.f32.mrf.mxu0
        %296 = vmatprep.mubr.bf16.mxu0 0
        %297 = vmatmul.mubr.bf16.gmra.mxu0 %v244
        %v298 = vpop.f32.mrf.mxu0
        %v299 = vadd.f32 0.0, %v298
        %v300 = vpop.f32.mrf.mxu0
        %v301 = vpop.f32.mrf.mxu0
        %v302 = vadd.f32 0.0, %v301
        %v303 = vpop.f32.mrf.mxu0
        %304 = vmatprep.mubr.bf16.mxu0 0
        %305 = vmatmul.mubr.bf16.gmra.mxu0 %v247
        %v306 = vpop.f32.mrf.mxu0
        %v307 = vadd.f32 0.0, %v306
        %v308 = vpop.f32.mrf.mxu0
        %v309 = vpop.f32.mrf.mxu0
        %v310 = vadd.f32 0.0, %v309
        %v311 = vpop.f32.mrf.mxu0
        %312 = vmatprep.mubr.bf16.mxu0 0
        %313 = vmatmul.mubr.bf16.gmra.mxu0 %v250
        %v314 = vpop.f32.mrf.mxu0
        %v315 = vadd.f32 0.0, %v314
        %v316 = vpop.f32.mrf.mxu0
        %v317 = vpop.f32.mrf.mxu0
        %v318 = vadd.f32 0.0, %v317
        %v319 = vpop.f32.mrf.mxu0
        %320 = vdwg.mxu0
        %v329 = vunpack.c.l.b16 %v199
        %v330 = vunpack.c.l.b16 %v200
        %v331 = vunpack.c.l.b16 %v201
        %v332 = vunpack.c.l.b16 %v202
        %v333 = vunpack.c.l.b16 %v203
        %v334 = vunpack.c.l.b16 %v204
        %v335 = vunpack.c.l.b16 %v205
        %v336 = vunpack.c.l.b16 %v206
        %v337 = vpack.c.b16 %v330, %v329
        %v338 = vpack.c.b16 %v332, %v331
        %v339 = vpack.c.b16 %v334, %v333
        %v340 = vpack.c.b16 %v336, %v335
        %v342 = vsel %vm239, %v337, 0
        %v345 = vsel %vm239, %v338, 0
        %v348 = vsel %vm239, %v339, 0
        %v351 = vsel %vm239, %v340, 0
        %v354 = vsel %vm252, %v207, 0
        %356 = vmatprep.subr.bf16.mxu0 0
        %357 = vmatpush1.bf16.msra.mxu0 0
        %358 = vmatprep.subr.bf16.mxu0 0
        %359 = vmatpush1.bf16.msra.mxu0 0
        %360 = vmatprep.subr.bf16.mxu0 0
        %361 = vmatpush1.bf16.msra.mxu0 0
        %362 = vmatprep.subr.bf16.mxu0 0
        %363 = vmatpush1.bf16.msra.mxu0 0
        %364 = vmatprep.subr.bf16.mxu0 0
        %365 = vmatpush1.bf16.msra.mxu0 0
        %366 = vmatprep.subr.bf16.mxu0 0
        %367 = vmatpush1.bf16.msra.mxu0 0
        %368 = vmatprep.subr.bf16.mxu0 0
        %369 = vmatpush1.bf16.msra.mxu0 0
        %370 = vmatprep.subr.bf16.mxu0 0
        %371 = vmatpush1.bf16.msra.mxu0 %v354
        %372 = vmatprep.subr.bf16.mxu0 0
        %373 = vmatpush2.bf16.msra.mxu0 0
        %374 = vmatprep.subr.bf16.mxu0 0
        %375 = vmatpush2.bf16.msra.mxu0 0
        %376 = vmatprep.subr.bf16.mxu0 0
        %377 = vmatpush2.bf16.msra.mxu0 0
        %378 = vmatprep.subr.bf16.mxu0 0
        %379 = vmatpush2.bf16.msra.mxu0 0
        %380 = vmatprep.subr.bf16.mxu0 0
        %381 = vmatpush2.bf16.msra.mxu0 0
        %382 = vmatprep.subr.bf16.mxu0 0
        %383 = vmatpush2.bf16.msra.mxu0 0
        %384 = vmatprep.subr.bf16.mxu0 0
        %385 = vmatpush2.bf16.msra.mxu0 0
        %386 = vmatprep.subr.bf16.mxu0 0
        %387 = vmatpush2.bf16.msra.mxu0 0
        %388 = vmatprep.mubr.bf16.mxu0 0
        %389 = vmatmul.mubr.bf16.gmra.mxu0 %v342
        %v390 = vpop.f32.mrf.mxu0
        %v391 = vadd.f32 %v291, %v390
        %v392 = vpop.f32.mrf.mxu0
        %v393 = vpop.f32.mrf.mxu0
        %v394 = vadd.f32 %v294, %v393
        %v395 = vpop.f32.mrf.mxu0
        %396 = vmatprep.mubr.bf16.mxu0 0
        %397 = vmatmul.mubr.bf16.gmra.mxu0 %v345
        %v398 = vpop.f32.mrf.mxu0
        %v399 = vadd.f32 %v299, %v398
        %v400 = vpop.f32.mrf.mxu0
        %v401 = vpop.f32.mrf.mxu0
        %v402 = vadd.f32 %v302, %v401
        %v403 = vpop.f32.mrf.mxu0
        %404 = vmatprep.mubr.bf16.mxu0 0
        %405 = vmatmul.mubr.bf16.gmra.mxu0 %v348
        %v406 = vpop.f32.mrf.mxu0
        %v407 = vadd.f32 %v307, %v406
        %v408 = vpop.f32.mrf.mxu0
        %v409 = vpop.f32.mrf.mxu0
        %v410 = vadd.f32 %v310, %v409
        %v411 = vpop.f32.mrf.mxu0
        %412 = vmatprep.mubr.bf16.mxu0 0
        %413 = vmatmul.mubr.bf16.gmra.mxu0 %v351
        %v414 = vpop.f32.mrf.mxu0
        %v415 = vadd.f32 %v315, %v414
        %v416 = vpop.f32.mrf.mxu0
        %v417 = vpop.f32.mrf.mxu0
        %v418 = vadd.f32 %v318, %v417
        %v419 = vpop.f32.mrf.mxu0
        %420 = vdwg.mxu0
        %v421 = vpack.c.bf16 %v391, %v391
        %v422 = vpack.c.bf16 %v394, %v394
        %v423 = vpack.c.bf16 %v399, %v399
        %v424 = vpack.c.bf16 %v402, %v402
        %v425 = vpack.c.bf16 %v407, %v407
        %v426 = vpack.c.bf16 %v410, %v410
        %v427 = vpack.c.bf16 %v415, %v415
        %v428 = vpack.c.bf16 %v418, %v418
        %429 = vst [vmem:[%s195] sm:$0xf] %v421
        %430 = vst [vmem:[%s195 + $0x4] sm:$0xf] %v422
        %431 = vst [vmem:[%s195 + $0x8] sm:$0xf] %v423
        %432 = vst [vmem:[%s195 + $0xc] sm:$0xf] %v424
        %433 = vst [vmem:[%s195 + $0x10] sm:$0xf] %v425
        %434 = vst [vmem:[%s195 + $0x14] sm:$0xf] %v426
        %435 = vst [vmem:[%s195 + $0x18] sm:$0xf] %v427
        %436 = vst [vmem:[%s195 + $0x1c] sm:$0xf] %v428
        %s437 = sand.u32 %s91, 1
        %s438 = scalar_lea.sflag [#allocation4], %s437
        %s439 = sand.u32 %s91, 1
        %s440 = smul.addr %s439, 32
        %s441 = scalar_lea.vmem [#allocation7], %s440
        // Predicated region
        $region37: #{tpu_custom_call.1} parent=27 // pred_check
          %p442 = pneg %p101
        $region38: #{tpu_custom_call.1} parent=27 // pred_check_branch
          %444 = sbr.rel (%p442) target = $region40
        $region39: #{tpu_custom_call.1} parent=27 // pred_region
          %s445 = smul.u32 8, %s25
          %s447 = ssub.s32 512, 512
          %448 = vsyncadd %s438, %s447
          %s449 = smul.addr %s24, 8
          %s450 = sadd.s32 %s445, %s449
          %s451 = smul.addr %s450, 64
          %s452 = scalar_lea.hbm %s2, %s451
          %s453 = sshll.u32 %s441, 4
          %s454 = int_to_ptr.vmem [resolvable:$true] %s453
          %459 = dma.vmem_to_hbm [thread:$0]  %s454, 512, %s452, %s438, 64, 64, 4
        $region40: #{tpu_custom_call.1} parent=27 // pred_fallthru
          _
      $region28: #{tpu_custom_call.1} parent=5 // pred_fallthru
        _
      %p460 = scmp.le.s32.totalorder 2, %s15
      // Predicated region
      $region41: #{tpu_custom_call.1} parent=5 // pred_check
        %p461 = pneg %p460
      $region42: #{tpu_custom_call.1} parent=5 // pred_check_branch
        %463 = sbr.rel (%p461) target = $region44
      $region43: #{tpu_custom_call.1} parent=5 // pred_region
        %s464 = ssub.s32 %s15, 2
        // Predicated region
        $region45: #{tpu_custom_call.1} parent=43 // pred_check
          %p465 = pneg %p107
        $region46: #{tpu_custom_call.1} parent=43 // pred_check_branch
          %467 = sbr.rel (%p465) target = $region48
        $region47: #{tpu_custom_call.1} parent=43 // pred_region
          %s468 = sand.u32 %s92, 1
          %s469 = scalar_lea.sflag [#allocation4], %s468
          %s470 = sand.u32 %s92, 1
          %s471 = smul.addr %s470, 32
          %s472 = scalar_lea.vmem [#allocation7], %s471
          %473 = dma.done %s469, 512
        $region48: #{tpu_custom_call.1} parent=43 // pred_fallthru
          _
      $region44: #{tpu_custom_call.1} parent=5 // pred_fallthru
        _
    $region6: #{tpu_custom_call.1} parent=1 // loop_footer
      %s19 = sadd.s32 1, %s15
    $region7: #{tpu_custom_call.1} parent=1 // loop_footer_branch
      %14 = sbr.rel target = $region3
    $region8: #{tpu_custom_call.1} parent=1 // loop_exit
      _
    %474 = vsyncpa [#allocation3], 1
    %s475 = scalar_lea.sflag [#allocation3], 1
    %476 = vsyncpa %s475, 1
    %477 = vsyncpa [#allocation6], 1
    %478 = vsyncpa [#allocation4], 1
    %s479 = scalar_lea.sflag [#allocation4], 1
    %480 = vsyncpa %s479, 1

</llo_original>
